<compile_context>
chip_gen: v6e
topology: v6e:2x2x1
jax: 0.10.0
libtpu: 0.0.40
codegen_flags: <defaults>
</compile_context>

<pallas_src>
import jax
import jax.numpy as jnp
from jax.experimental import pallas as pl
from jax.experimental.pallas import tpu as pltpu

IN_FEATURES = 784
OUT_FEATURES = 10
N_PAD = 128            # lane-dense output width (unmasked vst, clean MXU tile)
MAX_TM = 1024          # batch tile rows; fits default scoped VMEM on v5e/v6e/v7x


def linear_kernel(x_ref, w_ref, b_ref, o_ref):
    # x_ref: (TM, 784) f32 streamed from HBM; bf16 cast on the VPU hides under DMA.
    # w_ref: (784, 128) bf16 (resident across grid); b_ref: (1, 128) f32.
    a = x_ref[...].astype(jnp.bfloat16)
    acc = jnp.dot(a, w_ref[...], preferred_element_type=jnp.float32)
    o_ref[...] = (acc + b_ref[...]).astype(o_ref.dtype)   # bf16 lane-dense store


def _round_up(n, m):
    return ((n + m - 1) // m) * m


def prepare_params(w, b):
    """One-time pad/cast of the Linear params into the kernel layout.

    w: (784, 10) f32 (transposed vs torch's (out, in) so the kernel does x @ w)
    b: (10,) f32
    Returns w_p: (784, 128) bf16 and b_p: (1, 128) f32, lanes 10..127 == 0.
    """
    w_p = jnp.zeros((IN_FEATURES, N_PAD), jnp.bfloat16)
    w_p = w_p.at[:, :OUT_FEATURES].set(w.astype(jnp.bfloat16))
    b_p = jnp.zeros((1, N_PAD), jnp.float32)
    b_p = b_p.at[0, :OUT_FEATURES].set(b.astype(jnp.float32))
    return w_p, b_p


def random_model_forward(x, w_p, b_p):
    """x: (B, ...) f32 with prod(trailing dims) == 784. Returns (B, 10) f32 logits."""
    B = x.shape[0]
    x_flat = x.reshape(B, -1)                              # (B, 784)

    # Batch tile: multiple of 8 sublanes; ~B/2 so large batches get >= 2 grid
    # steps (megacore split on v7x), capped at MAX_TM for VMEM on all gens.
    TM = min(MAX_TM, _round_up(max(pl.cdiv(B, 2), 1), 8))
    grid_m = pl.cdiv(B, TM)

    out_padded = pl.pallas_call(
        linear_kernel,
        out_shape=jax.ShapeDtypeStruct((B, N_PAD), jnp.bfloat16),
        grid_spec=pltpu.PrefetchScalarGridSpec(
            num_scalar_prefetch=0,
            grid=(grid_m,),
            in_specs=[
                pl.BlockSpec((TM, IN_FEATURES), lambda i: (i, 0)),
                pl.BlockSpec((IN_FEATURES, N_PAD), lambda i: (0, 0)),
                pl.BlockSpec((1, N_PAD), lambda i: (0, 0)),
            ],
            out_specs=pl.BlockSpec((TM, N_PAD), lambda i: (i, 0)),
        ),
        compiler_params=pltpu.CompilerParams(
            dimension_semantics=("parallel",)),
    )(x_flat, w_p, b_p)

    # Out-of-range rows of the last partial block never reach HBM (masked
    # stores); padded lanes 10..127 are exact zeros, so just slice them off.
    return out_padded[:, :OUT_FEATURES].astype(jnp.float32)


if __name__ == "__main__":
    key = jax.random.PRNGKey(0)
    k_x, k_w, k_b = jax.random.split(key, 3)

    # Small MNIST-shaped batch consistent with Linear(784, 10).
    x = jax.random.normal(k_x, (2, 1, 28, 28), jnp.float32)

    # Mirror torch.nn.Linear default init: U(-1/sqrt(fan_in), 1/sqrt(fan_in)).
    bound = IN_FEATURES ** -0.5
    w = jax.random.uniform(k_w, (IN_FEATURES, OUT_FEATURES), jnp.float32,
                           -bound, bound)
    b = jax.random.uniform(k_b, (OUT_FEATURES,), jnp.float32, -bound, bound)

    w_p, b_p = prepare_params(w, b)

    out = random_model_forward(x, w_p, b_p)
    out = jax.block_until_ready(out)

    # Sanity check against plain-JAX f32 reference (bf16 matmul -> loose tol).
    ref = x.reshape(x.shape[0], -1) @ w + b
    assert out.shape == (x.shape[0], OUT_FEATURES)
    assert jnp.allclose(out, ref, atol=5e-2, rtol=5e-2), (
        float(jnp.max(jnp.abs(out - ref))))

    print("KERNEL_OK")
</pallas_src>

<mosaic_0001>
module attributes {stable_mosaic.version = 11 : i64} {
  func.func @linear_kernel(%arg0: i32, %arg1: memref<8x784xf32, #tpu.memory_space<vmem>>, %arg2: memref<784x128xbf16, #tpu.memory_space<vmem>>, %arg3: memref<1x128xf32, #tpu.memory_space<vmem>>, %arg4: memref<8x128xbf16, #tpu.memory_space<vmem>>) attributes {dimension_semantics = [#tpu.dimension_semantics<parallel>], iteration_bounds = array<i64: 1>, scalar_prefetch = 0 : i64, scratch_operands = 0 : i64, tpu.core_type = #tpu.core_type<tc>, window_params = [{transform_indices = @transform_0, window_bounds = array<i64: 8, 784>}, {pipeline_mode = #tpu.pipeline_mode<synchronous>, transform_indices = @transform_1, window_bounds = array<i64: 784, 128>}, {pipeline_mode = #tpu.pipeline_mode<synchronous>, transform_indices = @transform_2, window_bounds = array<i64: 1, 128>}, {transform_indices = @transform_3, window_bounds = array<i64: 8, 128>}]} {
    %c0 = arith.constant 0 : index
    %c0_0 = arith.constant 0 : index
    %0 = vector.load %arg1[%c0, %c0_0] : memref<8x784xf32, #tpu.memory_space<vmem>>, vector<8x784xf32>
    %1 = arith.truncf %0 : vector<8x784xf32> to vector<8x784xbf16>
    %c0_1 = arith.constant 0 : index
    %c0_2 = arith.constant 0 : index
    %2 = vector.load %arg2[%c0_1, %c0_2] : memref<784x128xbf16, #tpu.memory_space<vmem>>, vector<784x128xbf16>
    %cst = arith.constant dense<0.000000e+00> : vector<8x128xf32>
    %3 = tpu.matmul %1, %2, %cst {dimension_numbers = #tpu.dot_dimension_numbers<[1], [0], [0], [1], [0, 0, 1, 1], [], []>} : vector<8x784xbf16>, vector<784x128xbf16>, vector<8x128xf32> -> vector<8x128xf32>
    %c0_3 = arith.constant 0 : index
    %c0_4 = arith.constant 0 : index
    %4 = vector.load %arg3[%c0_3, %c0_4] : memref<1x128xf32, #tpu.memory_space<vmem>>, vector<1x128xf32>
    %5 = vector.broadcast %4 : vector<1x128xf32> to vector<8x128xf32>
    %6 = arith.addf %3, %5 : vector<8x128xf32>
    %7 = arith.truncf %6 : vector<8x128xf32> to vector<8x128xbf16>
    %c0_5 = arith.constant 0 : index
    %c0_6 = arith.constant 0 : index
    %8 = vector.load %arg4[%c0_5, %c0_6] : memref<8x128xbf16, #tpu.memory_space<vmem>>, vector<8x128xbf16>
    tpu.vector_store %arg4[%c0_5, %c0_6], %7 {strides = array<i32>} : memref<8x128xbf16, #tpu.memory_space<vmem>>, vector<8x128xbf16>,
    return
  }
  func.func @transform_0(%arg0: i32) -> (i32, i32) {
    %c0_i32 = arith.constant 0 : i32
    %c0_i32_0 = arith.constant 0 : i32
    return %arg0, %c0_i32 : i32, i32
  }
  func.func @transform_1(%arg0: i32) -> (i32, i32) {
    %c0_i32 = arith.constant 0 : i32
    %c0_i32_0 = arith.constant 0 : i32
    %c0_i32_1 = arith.constant 0 : i32
    return %c0_i32, %c0_i32_0 : i32, i32
  }
  func.func @transform_2(%arg0: i32) -> (i32, i32) {
    %c0_i32 = arith.constant 0 : i32
    %c0_i32_0 = arith.constant 0 : i32
    %c0_i32_1 = arith.constant 0 : i32
    return %c0_i32, %c0_i32_0 : i32, i32
  }
  func.func @transform_3(%arg0: i32) -> (i32, i32) {
    %c0_i32 = arith.constant 0 : i32
    %c0_i32_0 = arith.constant 0 : i32
    return %arg0, %c0_i32 : i32, i32
  }
}

</mosaic_0001>

<llo_original>
// kernel: tpu_custom_call.1
$region0: #{tpu_custom_call.1}
  #allocation0 [shape = 'u32[]', space=smem, size = 0x4, offset = 0x4, fixed_abs, tag = 'smem constant byte address 0x4 - core index']
  #allocation1 [shape = 'u32[144,128]{1,0:T(1,128)}', space=vmem, size = 0x12000, scoped, tag = 'internal scratch']
  %s0 = inlined_call_operand.hbm [shape: f32[2,784], index: 0, kind: input, shape index: {}]
  %s1 = inlined_call_operand.hbm [shape: bf16[784,128], index: 1, kind: input, shape index: {}]
  %s2 = inlined_call_operand.vmem [shape: f32[1,128], index: 2, kind: input, shape index: {}]
  %s3 = inlined_call_operand.hbm [shape: bf16[2,128], index: 3, kind: output, shape index: {}]
  %s4 = sld [smem:[#allocation0]]
  $region30: #{tpu_custom_call.1} parent=0
    _
  %s6 = ssub.s32 1, %s4
  %s7 = scalar_select 0, %s6, %s4
  $region1: #{tpu_custom_call.1} parent=0
    #allocation2 [shape = 'u8[28672]{0}', space=vmem, size = 0x7000, scoped, tag = 'input window, operand 0, single buffered']
    #allocation3 [shape = 's32[1]{0}', space=sflag, size = 0x4, scoped, tag = 'scoped memory for tpu_custom_call.1']
    #allocation4 [shape = 's32[1]{0}', space=sflag, size = 0x4, scoped, tag = 'scoped memory for tpu_custom_call.1']
    #allocation5 [shape = 'u8[200704]{0}', space=vmem, size = 0x31000, scoped, tag = 'input window, operand 1, single buffered']
    #allocation6 [shape = 's32[1]{0}', space=sflag, size = 0x4, scoped, tag = 'scoped memory for tpu_custom_call.1']
    #allocation7 [shape = 'u8[2048]{0}', space=vmem, size = 0x800, scoped, tag = 'output window, operand 0, single buffered']
    %8 = vsyncpa [#allocation3], 0
    %9 = vsyncpa [#allocation6], 0
    %10 = vsyncpa [#allocation4], 0
    // Predicated region
    $region2: #{tpu_custom_call.1} parent=1 // pred_check
      _
    $region3: #{tpu_custom_call.1} parent=1 // pred_check_branch
      %12 = sbr.rel (0) target = $region5
    $region4: #{tpu_custom_call.1} parent=1 // pred_region
      %s14 = ssub.s32 896, 224
      %15 = vsyncadd [#allocation3], %s14
      %s16 = sshll.u32 [#allocation2], 4
      %s17 = int_to_ptr.vmem [resolvable:$true] %s16
      %22 = dma.hbm_to_vmem [thread:$0]  %s0, 224, %s17, [#allocation3], 224, 224, 14
    $region5: #{tpu_custom_call.1} parent=1 // pred_fallthru
      _
    // Predicated region
    $region6: #{tpu_custom_call.1} parent=1 // pred_check
      _
    $region7: #{tpu_custom_call.1} parent=1 // pred_check_branch
      %24 = sbr.rel (0) target = $region9
    $region8: #{tpu_custom_call.1} parent=1 // pred_region
      %s26 = ssub.s32 6272, 6272
      %27 = vsyncadd [#allocation6], %s26
      %s28 = sshll.u32 [#allocation5], 4
      %s29 = int_to_ptr.vmem [resolvable:$true] %s28
      %34 = dma.hbm_to_vmem [thread:$0]  %s1, 6272, %s29, [#allocation6], 64, 64, 4
    $region9: #{tpu_custom_call.1} parent=1 // pred_fallthru
      _
    // Predicated region
    $region10: #{tpu_custom_call.1} parent=1 // pred_check
      _
    $region11: #{tpu_custom_call.1} parent=1 // pred_check_branch
      %36 = sbr.rel (0) target = $region13
    $region12: #{tpu_custom_call.1} parent=1 // pred_region
      _
    $region13: #{tpu_custom_call.1} parent=1 // pred_fallthru
      _
    // Predicated region
    $region14: #{tpu_custom_call.1} parent=1 // pred_check
      _
    $region15: #{tpu_custom_call.1} parent=1 // pred_check_branch
      %38 = sbr.rel (0) target = $region17
    $region16: #{tpu_custom_call.1} parent=1 // pred_region
      %39 = dma.done [#allocation3], 896
    $region17: #{tpu_custom_call.1} parent=1 // pred_fallthru
      _
    // Predicated region
    $region18: #{tpu_custom_call.1} parent=1 // pred_check
      _
    $region19: #{tpu_custom_call.1} parent=1 // pred_check_branch
      %41 = sbr.rel (0) target = $region21
    $region20: #{tpu_custom_call.1} parent=1 // pred_region
      %42 = dma.done [#allocation6], 6272
    $region21: #{tpu_custom_call.1} parent=1 // pred_fallthru
      _
    %v44 = vld [vmem:[#allocation2] sm:$0xff]
    %v45 = vld [vmem:[#allocation2 + $0x8] sm:$0x3f]
    %v46 = vld [vmem:[#allocation2 + $0xe] sm:$0xff]
    %v47 = vld [vmem:[#allocation2 + $0x16] sm:$0x3f]
    %v48 = vld [vmem:[#allocation2 + $0x1c] sm:$0xff]
    %v49 = vld [vmem:[#allocation2 + $0x24] sm:$0x3f]
    %v50 = vld [vmem:[#allocation2 + $0x2a] sm:$0xff]
    %v51 = vld [vmem:[#allocation2 + $0x32] sm:$0x3f]
    %v60 = vcombine.low %v44, %v46
    %v61 = vcombine.high %v44, %v46
    %v62 = vcombine.low %v48, %v50
    %v63 = vcombine.high %v48, %v50
    %v65 = vunpack.c.l.s4 1983009808
    %v66 = vunpack.c.0.s8 %v65
    %v67 = vlaneseq
    %v68 = vshrl.u32 %v67, 7
    %v69 = vsub.s32 %v66, %v68
    %v70 = vrot.slane %v60, %v69
    %v72 = vunpack.c.l.s4 1983009808
    %v73 = vunpack.c.0.s8 %v72
    %v74 = vlaneseq
    %v75 = vshrl.u32 %v74, 7
    %v76 = vsub.s32 %v73, %v75
    %v77 = vrot.slane %v61, %v76
    %v79 = vunpack.c.l.s4 1983009808
    %v80 = vunpack.c.0.s8 %v79
    %v81 = vlaneseq
    %v82 = vshrl.u32 %v81, 7
    %v83 = vsub.s32 %v80, %v82
    %v84 = vrot.slane %v62, %v83
    %v86 = vunpack.c.l.s4 1983009808
    %v87 = vunpack.c.0.s8 %v86
    %v88 = vlaneseq
    %v89 = vshrl.u32 %v88, 7
    %v90 = vsub.s32 %v87, %v89
    %v91 = vrot.slane %v63, %v90
    %v92 = vcombine.low %v70, %v84
    %v93 = vcombine.high %v70, %v84
    %v94 = vcombine.low %v77, %v91
    %v95 = vcombine.high %v77, %v91
    %v96 = vcombine.low %v45, %v47
    %v97 = vcombine.high %v45, %v47
    %v98 = vcombine.low %v49, %v51
    %v99 = vcombine.high %v49, %v51
    %v101 = vunpack.c.l.s4 1983009808
    %v102 = vunpack.c.0.s8 %v101
    %v103 = vlaneseq
    %v104 = vshrl.u32 %v103, 7
    %v105 = vsub.s32 %v102, %v104
    %v106 = vrot.slane %v96, %v105
    %v108 = vunpack.c.l.s4 1983009808
    %v109 = vunpack.c.0.s8 %v108
    %v110 = vlaneseq
    %v111 = vshrl.u32 %v110, 7
    %v112 = vsub.s32 %v109, %v111
    %v113 = vrot.slane %v97, %v112
    %v115 = vunpack.c.l.s4 1983009808
    %v116 = vunpack.c.0.s8 %v115
    %v117 = vlaneseq
    %v118 = vshrl.u32 %v117, 7
    %v119 = vsub.s32 %v116, %v118
    %v120 = vrot.slane %v98, %v119
    %v122 = vunpack.c.l.s4 1983009808
    %v123 = vunpack.c.0.s8 %v122
    %v124 = vlaneseq
    %v125 = vshrl.u32 %v124, 7
    %v126 = vsub.s32 %v123, %v125
    %v127 = vrot.slane %v99, %v126
    %v128 = vcombine.low %v106, %v120
    %v129 = vcombine.high %v106, %v120
    %v130 = vcombine.low %v113, %v127
    %v138 = vpack.c.bf16 %v92, %v92
    %v139 = vpack.c.bf16 %v93, %v93
    %v140 = vpack.c.bf16 %v94, %v94
    %v141 = vpack.c.bf16 %v95, %v95
    %v142 = vpack.c.bf16 %v128, %v128
    %v143 = vpack.c.bf16 %v129, %v129
    %v144 = vpack.c.bf16 %v130, %v130
    %v145 = vld [vmem:[#allocation5] sm:$0xf]
    %v146 = vld [vmem:[#allocation5 + $0x4] sm:$0xf]
    %v147 = vld [vmem:[#allocation5 + $0x8] sm:$0xf]
    %v148 = vld [vmem:[#allocation5 + $0xc] sm:$0xf]
    %v149 = vld [vmem:[#allocation5 + $0x10] sm:$0xf]
    %v150 = vld [vmem:[#allocation5 + $0x14] sm:$0xf]
    %v151 = vld [vmem:[#allocation5 + $0x18] sm:$0xf]
    %v152 = vld [vmem:[#allocation5 + $0x1c] sm:$0xf]
    %v153 = vld [vmem:[#allocation5 + $0x20] sm:$0xf]
    %v154 = vld [vmem:[#allocation5 + $0x24] sm:$0xf]
    %v155 = vld [vmem:[#allocation5 + $0x28] sm:$0xf]
    %v156 = vld [vmem:[#allocation5 + $0x2c] sm:$0xf]
    %v157 = vld [vmem:[#allocation5 + $0x30] sm:$0xf]
    %v158 = vld [vmem:[#allocation5 + $0x34] sm:$0xf]
    %v159 = vld [vmem:[#allocation5 + $0x38] sm:$0xf]
    %v160 = vld [vmem:[#allocation5 + $0x3c] sm:$0xf]
    %v161 = vld [vmem:[#allocation5 + $0x40] sm:$0xf]
    %v162 = vld [vmem:[#allocation5 + $0x44] sm:$0xf]
    %v163 = vld [vmem:[#allocation5 + $0x48] sm:$0xf]
    %v164 = vld [vmem:[#allocation5 + $0x4c] sm:$0xf]
    %v165 = vld [vmem:[#allocation5 + $0x50] sm:$0xf]
    %v166 = vld [vmem:[#allocation5 + $0x54] sm:$0xf]
    %v167 = vld [vmem:[#allocation5 + $0x58] sm:$0xf]
    %v168 = vld [vmem:[#allocation5 + $0x5c] sm:$0xf]
    %v169 = vld [vmem:[#allocation5 + $0x60] sm:$0xf]
    %v170 = vld [vmem:[#allocation5 + $0x64] sm:$0xf]
    %v171 = vld [vmem:[#allocation5 + $0x68] sm:$0xf]
    %v172 = vld [vmem:[#allocation5 + $0x6c] sm:$0xf]
    %v173 = vld [vmem:[#allocation5 + $0x70] sm:$0xf]
    %v174 = vld [vmem:[#allocation5 + $0x74] sm:$0xf]
    %v175 = vld [vmem:[#allocation5 + $0x78] sm:$0xf]
    %v176 = vld [vmem:[#allocation5 + $0x7c] sm:$0xf]
    %v177 = vld [vmem:[#allocation5 + $0x80] sm:$0xf]
    %v178 = vld [vmem:[#allocation5 + $0x84] sm:$0xf]
    %v179 = vld [vmem:[#allocation5 + $0x88] sm:$0xf]
    %v180 = vld [vmem:[#allocation5 + $0x8c] sm:$0xf]
    %v181 = vld [vmem:[#allocation5 + $0x90] sm:$0xf]
    %v182 = vld [vmem:[#allocation5 + $0x94] sm:$0xf]
    %v183 = vld [vmem:[#allocation5 + $0x98] sm:$0xf]
    %v184 = vld [vmem:[#allocation5 + $0x9c] sm:$0xf]
    %v185 = vld [vmem:[#allocation5 + $0xa0] sm:$0xf]
    %v186 = vld [vmem:[#allocation5 + $0xa4] sm:$0xf]
    %v187 = vld [vmem:[#allocation5 + $0xa8] sm:$0xf]
    %v188 = vld [vmem:[#allocation5 + $0xac] sm:$0xf]
    %v189 = vld [vmem:[#allocation5 + $0xb0] sm:$0xf]
    %v190 = vld [vmem:[#allocation5 + $0xb4] sm:$0xf]
    %v191 = vld [vmem:[#allocation5 + $0xb8] sm:$0xf]
    %v192 = vld [vmem:[#allocation5 + $0xbc] sm:$0xf]
    %v193 = vld [vmem:[#allocation5 + $0xc0] sm:$0xf]
    %v194 = vld [vmem:[#allocation5 + $0xc4] sm:$0xf]
    %v195 = vld [vmem:[#allocation5 + $0xc8] sm:$0xf]
    %v196 = vld [vmem:[#allocation5 + $0xcc] sm:$0xf]
    %v197 = vld [vmem:[#allocation5 + $0xd0] sm:$0xf]
    %v198 = vld [vmem:[#allocation5 + $0xd4] sm:$0xf]
    %v199 = vld [vmem:[#allocation5 + $0xd8] sm:$0xf]
    %v200 = vld [vmem:[#allocation5 + $0xdc] sm:$0xf]
    %v201 = vld [vmem:[#allocation5 + $0xe0] sm:$0xf]
    %v202 = vld [vmem:[#allocation5 + $0xe4] sm:$0xf]
    %v203 = vld [vmem:[#allocation5 + $0xe8] sm:$0xf]
    %v204 = vld [vmem:[#allocation5 + $0xec] sm:$0xf]
    %v205 = vld [vmem:[#allocation5 + $0xf0] sm:$0xf]
    %v206 = vld [vmem:[#allocation5 + $0xf4] sm:$0xf]
    %v207 = vld [vmem:[#allocation5 + $0xf8] sm:$0xf]
    %v208 = vld [vmem:[#allocation5 + $0xfc] sm:$0xf]
    %v209 = vld [vmem:[#allocation5 + $0x100] sm:$0xf]
    %v210 = vld [vmem:[#allocation5 + $0x104] sm:$0xf]
    %v211 = vld [vmem:[#allocation5 + $0x108] sm:$0xf]
    %v212 = vld [vmem:[#allocation5 + $0x10c] sm:$0xf]
    %v213 = vld [vmem:[#allocation5 + $0x110] sm:$0xf]
    %v214 = vld [vmem:[#allocation5 + $0x114] sm:$0xf]
    %v215 = vld [vmem:[#allocation5 + $0x118] sm:$0xf]
    %v216 = vld [vmem:[#allocation5 + $0x11c] sm:$0xf]
    %v217 = vld [vmem:[#allocation5 + $0x120] sm:$0xf]
    %v218 = vld [vmem:[#allocation5 + $0x124] sm:$0xf]
    %v219 = vld [vmem:[#allocation5 + $0x128] sm:$0xf]
    %v220 = vld [vmem:[#allocation5 + $0x12c] sm:$0xf]
    %v221 = vld [vmem:[#allocation5 + $0x130] sm:$0xf]
    %v222 = vld [vmem:[#allocation5 + $0x134] sm:$0xf]
    %v223 = vld [vmem:[#allocation5 + $0x138] sm:$0xf]
    %v224 = vld [vmem:[#allocation5 + $0x13c] sm:$0xf]
    %v225 = vld [vmem:[#allocation5 + $0x140] sm:$0xf]
    %v226 = vld [vmem:[#allocation5 + $0x144] sm:$0xf]
    %v227 = vld [vmem:[#allocation5 + $0x148] sm:$0xf]
    %v228 = vld [vmem:[#allocation5 + $0x14c] sm:$0xf]
    %v229 = vld [vmem:[#allocation5 + $0x150] sm:$0xf]
    %v230 = vld [vmem:[#allocation5 + $0x154] sm:$0xf]
    %v231 = vld [vmem:[#allocation5 + $0x158] sm:$0xf]
    %v232 = vld [vmem:[#allocation5 + $0x15c] sm:$0xf]
    %v233 = vld [vmem:[#allocation5 + $0x160] sm:$0xf]
    %v234 = vld [vmem:[#allocation5 + $0x164] sm:$0xf]
    %v235 = vld [vmem:[#allocation5 + $0x168] sm:$0xf]
    %v236 = vld [vmem:[#allocation5 + $0x16c] sm:$0xf]
    %v237 = vld [vmem:[#allocation5 + $0x170] sm:$0xf]
    %v238 = vld [vmem:[#allocation5 + $0x174] sm:$0xf]
    %v239 = vld [vmem:[#allocation5 + $0x178] sm:$0xf]
    %v240 = vld [vmem:[#allocation5 + $0x17c] sm:$0xf]
    %v241 = vld [vmem:[#allocation5 + $0x180] sm:$0xf]
    %v242 = vld [vmem:[#allocation5 + $0x184] sm:$0xf]
    %v243 = vld [vmem:[%s2] sm:$0x1]
    %v245 = vlaneseq
    %v246 = vshrl.u32 %v245, 7
    %v247 = vsub.s32 0, %v246
    %v248 = vrot.slane %v243, %v247
    %v348 = vunpack.c.l.b16 %v145
    %v349 = vunpack.c.l.b16 %v146
    %v350 = vunpack.c.l.b16 %v147
    %v351 = vunpack.c.l.b16 %v148
    %v352 = vunpack.c.l.b16 %v149
    %v353 = vunpack.c.l.b16 %v150
    %v354 = vunpack.c.l.b16 %v151
    %v355 = vunpack.c.l.b16 %v152
    %v356 = vunpack.c.l.b16 %v153
    %v357 = vunpack.c.l.b16 %v154
    %v358 = vunpack.c.l.b16 %v155
    %v359 = vunpack.c.l.b16 %v156
    %v360 = vunpack.c.l.b16 %v157
    %v361 = vunpack.c.l.b16 %v158
    %v362 = vunpack.c.l.b16 %v159
    %v363 = vunpack.c.l.b16 %v160
    %v364 = vunpack.c.l.b16 %v161
    %v365 = vunpack.c.l.b16 %v162
    %v366 = vunpack.c.l.b16 %v163
    %v367 = vunpack.c.l.b16 %v164
    %v368 = vunpack.c.l.b16 %v165
    %v369 = vunpack.c.l.b16 %v166
    %v370 = vunpack.c.l.b16 %v167
    %v371 = vunpack.c.l.b16 %v168
    %v372 = vunpack.c.l.b16 %v169
    %v373 = vunpack.c.l.b16 %v170
    %v374 = vunpack.c.l.b16 %v171
    %v375 = vunpack.c.l.b16 %v172
    %v376 = vunpack.c.l.b16 %v173
    %v377 = vunpack.c.l.b16 %v174
    %v378 = vunpack.c.l.b16 %v175
    %v379 = vunpack.c.l.b16 %v176
    %v380 = vunpack.c.l.b16 %v177
    %v381 = vunpack.c.l.b16 %v178
    %v382 = vunpack.c.l.b16 %v179
    %v383 = vunpack.c.l.b16 %v180
    %v384 = vunpack.c.l.b16 %v181
    %v385 = vunpack.c.l.b16 %v182
    %v386 = vunpack.c.l.b16 %v183
    %v387 = vunpack.c.l.b16 %v184
    %v388 = vunpack.c.l.b16 %v185
    %v389 = vunpack.c.l.b16 %v186
    %v390 = vunpack.c.l.b16 %v187
    %v391 = vunpack.c.l.b16 %v188
    %v392 = vunpack.c.l.b16 %v189
    %v393 = vunpack.c.l.b16 %v190
    %v394 = vunpack.c.l.b16 %v191
    %v395 = vunpack.c.l.b16 %v192
    %v396 = vunpack.c.l.b16 %v193
    %v397 = vunpack.c.l.b16 %v194
    %v398 = vunpack.c.l.b16 %v195
    %v399 = vunpack.c.l.b16 %v196
    %v400 = vunpack.c.l.b16 %v197
    %v401 = vunpack.c.l.b16 %v198
    %v402 = vunpack.c.l.b16 %v199
    %v403 = vunpack.c.l.b16 %v200
    %v404 = vunpack.c.l.b16 %v201
    %v405 = vunpack.c.l.b16 %v202
    %v406 = vunpack.c.l.b16 %v203
    %v407 = vunpack.c.l.b16 %v204
    %v408 = vunpack.c.l.b16 %v205
    %v409 = vunpack.c.l.b16 %v206
    %v410 = vunpack.c.l.b16 %v207
    %v411 = vunpack.c.l.b16 %v208
    %v412 = vunpack.c.l.b16 %v209
    %v413 = vunpack.c.l.b16 %v210
    %v414 = vunpack.c.l.b16 %v211
    %v415 = vunpack.c.l.b16 %v212
    %v416 = vunpack.c.l.b16 %v213
    %v417 = vunpack.c.l.b16 %v214
    %v418 = vunpack.c.l.b16 %v215
    %v419 = vunpack.c.l.b16 %v216
    %v420 = vunpack.c.l.b16 %v217
    %v421 = vunpack.c.l.b16 %v218
    %v422 = vunpack.c.l.b16 %v219
    %v423 = vunpack.c.l.b16 %v220
    %v424 = vunpack.c.l.b16 %v221
    %v425 = vunpack.c.l.b16 %v222
    %v426 = vunpack.c.l.b16 %v223
    %v427 = vunpack.c.l.b16 %v224
    %v428 = vunpack.c.l.b16 %v225
    %v429 = vunpack.c.l.b16 %v226
    %v430 = vunpack.c.l.b16 %v227
    %v431 = vunpack.c.l.b16 %v228
    %v432 = vunpack.c.l.b16 %v229
    %v433 = vunpack.c.l.b16 %v230
    %v434 = vunpack.c.l.b16 %v231
    %v435 = vunpack.c.l.b16 %v232
    %v436 = vunpack.c.l.b16 %v233
    %v437 = vunpack.c.l.b16 %v234
    %v438 = vunpack.c.l.b16 %v235
    %v439 = vunpack.c.l.b16 %v236
    %v440 = vunpack.c.l.b16 %v237
    %v441 = vunpack.c.l.b16 %v238
    %v442 = vunpack.c.l.b16 %v239
    %v443 = vunpack.c.l.b16 %v240
    %v444 = vunpack.c.l.b16 %v241
    %v445 = vunpack.c.l.b16 %v242
    %v446 = vpack.c.b16 %v349, %v348
    %v447 = vpack.c.b16 %v351, %v350
    %v448 = vpack.c.b16 %v353, %v352
    %v449 = vpack.c.b16 %v355, %v354
    %v450 = vpack.c.b16 %v357, %v356
    %v451 = vpack.c.b16 %v359, %v358
    %v452 = vpack.c.b16 %v361, %v360
    %v453 = vpack.c.b16 %v363, %v362
    %v454 = vpack.c.b16 %v365, %v364
    %v455 = vpack.c.b16 %v367, %v366
    %v456 = vpack.c.b16 %v369, %v368
    %v457 = vpack.c.b16 %v371, %v370
    %v458 = vpack.c.b16 %v373, %v372
    %v459 = vpack.c.b16 %v375, %v374
    %v460 = vpack.c.b16 %v377, %v376
    %v461 = vpack.c.b16 %v379, %v378
    %v462 = vpack.c.b16 %v381, %v380
    %v463 = vpack.c.b16 %v383, %v382
    %v464 = vpack.c.b16 %v385, %v384
    %v465 = vpack.c.b16 %v387, %v386
    %v466 = vpack.c.b16 %v389, %v388
    %v467 = vpack.c.b16 %v391, %v390
    %v468 = vpack.c.b16 %v393, %v392
    %v469 = vpack.c.b16 %v395, %v394
    %v470 = vpack.c.b16 %v397, %v396
    %v471 = vpack.c.b16 %v399, %v398
    %v472 = vpack.c.b16 %v401, %v400
    %v473 = vpack.c.b16 %v403, %v402
    %v474 = vpack.c.b16 %v405, %v404
    %v475 = vpack.c.b16 %v407, %v406
    %v476 = vpack.c.b16 %v409, %v408
    %v477 = vpack.c.b16 %v411, %v410
    %v478 = vpack.c.b16 %v413, %v412
    %v479 = vpack.c.b16 %v415, %v414
    %v480 = vpack.c.b16 %v417, %v416
    %v481 = vpack.c.b16 %v419, %v418
    %v482 = vpack.c.b16 %v421, %v420
    %v483 = vpack.c.b16 %v423, %v422
    %v484 = vpack.c.b16 %v425, %v424
    %v485 = vpack.c.b16 %v427, %v426
    %v486 = vpack.c.b16 %v429, %v428
    %v487 = vpack.c.b16 %v431, %v430
    %v488 = vpack.c.b16 %v433, %v432
    %v489 = vpack.c.b16 %v435, %v434
    %v490 = vpack.c.b16 %v437, %v436
    %v491 = vpack.c.b16 %v439, %v438
    %v492 = vpack.c.b16 %v441, %v440
    %v493 = vpack.c.b16 %v443, %v442
    %v494 = vpack.c.b16 %v445, %v444
    %vm544 = vcmask 130048
    %v546 = vsel %vm544, %v144, 0
    %548 = vmatprep.subr.bf16.mxu0 0
    %549 = vmatpush1.bf16.msra.mxu0 %v453
    %550 = vmatprep.subr.bf16.mxu0 0
    %551 = vmatpush1.bf16.msra.mxu0 %v452
    %552 = vmatprep.subr.bf16.mxu0 0
    %553 = vmatpush1.bf16.msra.mxu0 %v451
    %554 = vmatprep.subr.bf16.mxu0 0
    %555 = vmatpush1.bf16.msra.mxu0 %v450
    %556 = vmatprep.subr.bf16.mxu0 0
    %557 = vmatpush1.bf16.msra.mxu0 %v449
    %558 = vmatprep.subr.bf16.mxu0 0
    %559 = vmatpush1.bf16.msra.mxu0 %v448
    %560 = vmatprep.subr.bf16.mxu0 0
    %561 = vmatpush1.bf16.msra.mxu0 %v447
    %562 = vmatprep.subr.bf16.mxu0 0
    %563 = vmatpush1.bf16.msra.mxu0 %v446
    %564 = vmatprep.subr.bf16.mxu0 0
    %565 = vmatpush2.bf16.msra.mxu0 %v461
    %566 = vmatprep.subr.bf16.mxu0 0
    %567 = vmatpush2.bf16.msra.mxu0 %v460
    %568 = vmatprep.subr.bf16.mxu0 0
    %569 = vmatpush2.bf16.msra.mxu0 %v459
    %570 = vmatprep.subr.bf16.mxu0 0
    %571 = vmatpush2.bf16.msra.mxu0 %v458
    %572 = vmatprep.subr.bf16.mxu0 0
    %573 = vmatpush2.bf16.msra.mxu0 %v457
    %574 = vmatprep.subr.bf16.mxu0 0
    %575 = vmatpush2.bf16.msra.mxu0 %v456
    %576 = vmatprep.subr.bf16.mxu0 0
    %577 = vmatpush2.bf16.msra.mxu0 %v455
    %578 = vmatprep.subr.bf16.mxu0 0
    %579 = vmatpush2.bf16.msra.mxu0 %v454
    %580 = vmatprep.mubr.bf16.mxu0 %v139
    %581 = vmatmul.mubr.bf16.gmra.mxu0 %v138
    %v582 = vpop.f32.mrf.mxu0
    %v583 = vadd.f32 %v248, %v582
    %v584 = vpop.f32.mrf.mxu0
    %v585 = vpop.f32.mrf.mxu0
    %v586 = vpop.f32.mrf.mxu0
    %587 = vdwg.mxu0
    %588 = vmatprep.subr.bf16.mxu0 0
    %589 = vmatpush1.bf16.msra.mxu0 %v469
    %590 = vmatprep.subr.bf16.mxu0 0
    %591 = vmatpush1.bf16.msra.mxu0 %v468
    %592 = vmatprep.subr.bf16.mxu0 0
    %593 = vmatpush1.bf16.msra.mxu0 %v467
    %594 = vmatprep.subr.bf16.mxu0 0
    %595 = vmatpush1.bf16.msra.mxu0 %v466
    %596 = vmatprep.subr.bf16.mxu0 0
    %597 = vmatpush1.bf16.msra.mxu0 %v465
    %598 = vmatprep.subr.bf16.mxu0 0
    %599 = vmatpush1.bf16.msra.mxu0 %v464
    %600 = vmatprep.subr.bf16.mxu0 0
    %601 = vmatpush1.bf16.msra.mxu0 %v463
    %602 = vmatprep.subr.bf16.mxu0 0
    %603 = vmatpush1.bf16.msra.mxu0 %v462
    %604 = vmatprep.subr.bf16.mxu0 0
    %605 = vmatpush2.bf16.msra.mxu0 %v477
    %606 = vmatprep.subr.bf16.mxu0 0
    %607 = vmatpush2.bf16.msra.mxu0 %v476
    %608 = vmatprep.subr.bf16.mxu0 0
    %609 = vmatpush2.bf16.msra.mxu0 %v475
    %610 = vmatprep.subr.bf16.mxu0 0
    %611 = vmatpush2.bf16.msra.mxu0 %v474
    %612 = vmatprep.subr.bf16.mxu0 0
    %613 = vmatpush2.bf16.msra.mxu0 %v473
    %614 = vmatprep.subr.bf16.mxu0 0
    %615 = vmatpush2.bf16.msra.mxu0 %v472
    %616 = vmatprep.subr.bf16.mxu0 0
    %617 = vmatpush2.bf16.msra.mxu0 %v471
    %618 = vmatprep.subr.bf16.mxu0 0
    %619 = vmatpush2.bf16.msra.mxu0 %v470
    %620 = vmatprep.mubr.bf16.mxu0 %v141
    %621 = vmatmul.mubr.bf16.gmra.mxu0 %v140
    %v622 = vpop.f32.mrf.mxu0
    %v623 = vadd.f32 %v583, %v622
    %v624 = vpop.f32.mrf.mxu0
    %v625 = vpop.f32.mrf.mxu0
    %v626 = vpop.f32.mrf.mxu0
    %627 = vdwg.mxu0
    %628 = vmatprep.subr.bf16.mxu0 0
    %629 = vmatpush1.bf16.msra.mxu0 %v485
    %630 = vmatprep.subr.bf16.mxu0 0
    %631 = vmatpush1.bf16.msra.mxu0 %v484
    %632 = vmatprep.subr.bf16.mxu0 0
    %633 = vmatpush1.bf16.msra.mxu0 %v483
    %634 = vmatprep.subr.bf16.mxu0 0
    %635 = vmatpush1.bf16.msra.mxu0 %v482
    %636 = vmatprep.subr.bf16.mxu0 0
    %637 = vmatpush1.bf16.msra.mxu0 %v481
    %638 = vmatprep.subr.bf16.mxu0 0
    %639 = vmatpush1.bf16.msra.mxu0 %v480
    %640 = vmatprep.subr.bf16.mxu0 0
    %641 = vmatpush1.bf16.msra.mxu0 %v479
    %642 = vmatprep.subr.bf16.mxu0 0
    %643 = vmatpush1.bf16.msra.mxu0 %v478
    %644 = vmatprep.subr.bf16.mxu0 0
    %645 = vmatpush2.bf16.msra.mxu0 %v493
    %646 = vmatprep.subr.bf16.mxu0 0
    %647 = vmatpush2.bf16.msra.mxu0 %v492
    %648 = vmatprep.subr.bf16.mxu0 0
    %649 = vmatpush2.bf16.msra.mxu0 %v491
    %650 = vmatprep.subr.bf16.mxu0 0
    %651 = vmatpush2.bf16.msra.mxu0 %v490
    %652 = vmatprep.subr.bf16.mxu0 0
    %653 = vmatpush2.bf16.msra.mxu0 %v489
    %654 = vmatprep.subr.bf16.mxu0 0
    %655 = vmatpush2.bf16.msra.mxu0 %v488
    %656 = vmatprep.subr.bf16.mxu0 0
    %657 = vmatpush2.bf16.msra.mxu0 %v487
    %658 = vmatprep.subr.bf16.mxu0 0
    %659 = vmatpush2.bf16.msra.mxu0 %v486
    %660 = vmatprep.mubr.bf16.mxu0 %v143
    %661 = vmatmul.mubr.bf16.gmra.mxu0 %v142
    %v662 = vpop.f32.mrf.mxu0
    %v663 = vadd.f32 %v623, %v662
    %v664 = vpop.f32.mrf.mxu0
    %v665 = vpop.f32.mrf.mxu0
    %v666 = vpop.f32.mrf.mxu0
    %667 = vdwg.mxu0
    %668 = vmatprep.subr.bf16.mxu0 0
    %669 = vmatpush1.bf16.msra.mxu0 0
    %670 = vmatprep.subr.bf16.mxu0 0
    %671 = vmatpush1.bf16.msra.mxu0 0
    %672 = vmatprep.subr.bf16.mxu0 0
    %673 = vmatpush1.bf16.msra.mxu0 0
    %674 = vmatprep.subr.bf16.mxu0 0
    %675 = vmatpush1.bf16.msra.mxu0 0
    %676 = vmatprep.subr.bf16.mxu0 0
    %677 = vmatpush1.bf16.msra.mxu0 0
    %678 = vmatprep.subr.bf16.mxu0 0
    %679 = vmatpush1.bf16.msra.mxu0 0
    %680 = vmatprep.subr.bf16.mxu0 0
    %681 = vmatpush1.bf16.msra.mxu0 0
    %682 = vmatprep.subr.bf16.mxu0 0
    %683 = vmatpush1.bf16.msra.mxu0 %v494
    %684 = vmatprep.subr.bf16.mxu0 0
    %685 = vmatpush2.bf16.msra.mxu0 0
    %686 = vmatprep.subr.bf16.mxu0 0
    %687 = vmatpush2.bf16.msra.mxu0 0
    %688 = vmatprep.subr.bf16.mxu0 0
    %689 = vmatpush2.bf16.msra.mxu0 0
    %690 = vmatprep.subr.bf16.mxu0 0
    %691 = vmatpush2.bf16.msra.mxu0 0
    %692 = vmatprep.subr.bf16.mxu0 0
    %693 = vmatpush2.bf16.msra.mxu0 0
    %694 = vmatprep.subr.bf16.mxu0 0
    %695 = vmatpush2.bf16.msra.mxu0 0
    %696 = vmatprep.subr.bf16.mxu0 0
    %697 = vmatpush2.bf16.msra.mxu0 0
    %698 = vmatprep.subr.bf16.mxu0 0
    %699 = vmatpush2.bf16.msra.mxu0 0
    %700 = vmatprep.mubr.bf16.mxu0 0
    %701 = vmatmul.mubr.bf16.gmra.mxu0 %v546
    %v702 = vpop.f32.mrf.mxu0
    %v703 = vadd.f32 %v663, %v702
    %v704 = vpop.f32.mrf.mxu0
    %v705 = vpop.f32.mrf.mxu0
    %v706 = vpop.f32.mrf.mxu0
    %707 = vdwg.mxu0
    %v708 = vpack.c.bf16 %v703, %v703
    %v711 = vunpack.c.l.s4 1966171168
    %v712 = vunpack.c.0.s8 %v711
    %v713 = vlaneseq
    %v714 = vshrl.u32 %v713, 7
    %v715 = vsub.s32 %v712, %v714
    %v716 = vrot.slane %v708, %v715
    %v717 = vcombine.high %v716, %v716
    %v719 = vunpack.c.l.s4 1966171168
    %v720 = vunpack.c.0.s8 %v719
    %v721 = vlaneseq
    %v722 = vshrl.u32 %v721, 7
    %v723 = vsub.s32 %v720, %v722
    %v724 = vrot.slane %v716, %v723
    %v726 = vunpack.c.l.s4 1966171168
    %v727 = vunpack.c.0.s8 %v726
    %v728 = vlaneseq
    %v729 = vshrl.u32 %v728, 7
    %v730 = vsub.s32 %v727, %v729
    %v731 = vrot.slane %v717, %v730
    %v732 = vcombine.high %v724, %v724
    %v733 = vcombine.high %v731, %v731
    %738 = vst [vmem:[#allocation7] sm:$0x1] %v724
    %739 = vst [vmem:[#allocation7 + $0x1] sm:$0x1] %v731
    %740 = vst [vmem:[#allocation7 + $0x2] sm:$0x1] %v732
    %741 = vst [vmem:[#allocation7 + $0x3] sm:$0x1] %v733
    // Predicated region
    $region22: #{tpu_custom_call.1} parent=1 // pred_check
      _
    $region23: #{tpu_custom_call.1} parent=1 // pred_check_branch
      %743 = sbr.rel (0) target = $region25
    $region24: #{tpu_custom_call.1} parent=1 // pred_region
      %s745 = ssub.s32 64, 16
      %746 = vsyncadd [#allocation4], %s745
      %s747 = sshll.u32 [#allocation7], 4
      %s748 = int_to_ptr.vmem [resolvable:$true] %s747
      %753 = dma.vmem_to_hbm [thread:$0]  %s748, 16, %s3, [#allocation4], 16, 16, 1
    $region25: #{tpu_custom_call.1} parent=1 // pred_fallthru
      _
    // Predicated region
    $region26: #{tpu_custom_call.1} parent=1 // pred_check
      _
    $region27: #{tpu_custom_call.1} parent=1 // pred_check_branch
      %755 = sbr.rel (0) target = $region29
    $region28: #{tpu_custom_call.1} parent=1 // pred_region
      %756 = dma.done [#allocation4], 64
    $region29: #{tpu_custom_call.1} parent=1 // pred_fallthru
      _
    %757 = vsyncpa [#allocation3], 1
    %758 = vsyncpa [#allocation6], 1
    %759 = vsyncpa [#allocation4], 1

</llo_original>
